<compile_context>
chip_gen: v5e
topology: v5e:2x2
jax: 0.10.0
libtpu: 0.0.40
codegen_flags: <defaults>
</compile_context>

<pallas_src>
import functools

import jax
import jax.numpy as jnp
from jax import lax
from jax.experimental import pallas as pl
from jax.experimental.pallas import tpu as pltpu


def encoder_kernel(x_ref, w_ref, *rest, layer_norm, eps):
    """o = relu(LN(W @ X^T)) for one tile of N.

    x_ref : (TM, C)  node-major concatenated [neigh_feats..., self_feat]   (bf16)
    w_ref : (D, C)   compress parameter (out_dim x compress_dim)           (bf16)
    gamma_ref, beta_ref : (D, 1) f32  (only when layer_norm=True)
    o_ref : (D, TM)  lane-dense output tile (PyTorch's (out_dim, N) layout)
    """
    if layer_norm:
        gamma_ref, beta_ref, o_ref = rest
    else:
        (o_ref,) = rest

    # (D, C) x (TM, C) contracting C -> (D, TM): MXU-native trans_b, no XLU transpose;
    # f32 accumulation regardless of the (bf16) input dtype.
    y = lax.dot_general(
        w_ref[...], x_ref[...],
        dimension_numbers=(((1,), (1,)), ((), ())),
        preferred_element_type=jnp.float32,
    )

    if layer_norm:
        d = y.shape[0]
        # Fused one-pass moments: sum and sum-of-squares together, then
        # var = (sumsq - D*mean^2)/(D-1).  Matches torch.std semantics: unbiased
        # variance, eps added to the std (not inside the sqrt).  Requires D > 1.
        # NOTE: LN is per-column, so stale rows from a partial last X block only
        # affect columns Pallas masks out on writeback.
        s = jnp.sum(y, axis=0, keepdims=True)            # (1, TM)
        sq = jnp.sum(y * y, axis=0, keepdims=True)       # (1, TM)
        mean = s * (1.0 / d)
        var = jnp.maximum((sq - d * mean * mean) * (1.0 / (d - 1)), 0.0)
        inv = pl.reciprocal(jnp.sqrt(var) + eps, approx=True)   # EUP slot, ~free
        y = gamma_ref[...] * ((y - mean) * inv) + beta_ref[...]

    o_ref[...] = jnp.maximum(y, 0.0).astype(o_ref.dtype)


def _xla_encoder(x_c, w_c, gamma, beta, *, layer_norm, eps, out_dtype):
    """Plain-XLA path for tiny N (kernel overhead / masked stores would dominate)."""
    y = jnp.dot(w_c, x_c.T, preferred_element_type=jnp.float32)       # (D, N) f32
    if layer_norm:
        d = y.shape[0]
        mean = jnp.mean(y, axis=0, keepdims=True)
        var = jnp.sum((y - mean) ** 2, axis=0, keepdims=True) / (d - 1)
        y = (gamma.reshape(d, 1).astype(jnp.float32) * (y - mean) / (jnp.sqrt(var) + eps)
             + beta.reshape(d, 1).astype(jnp.float32))
    return jnp.maximum(y, 0.0).astype(out_dtype)


def _pick_block_n(c, d, x_bytes, o_bytes, target=1024, vmem_budget=12 * 1024 * 1024):
    """Largest multiple of 256 <= target whose working set fits a conservative VMEM
    budget (v5e's 16 MiB scoped default minus headroom; v6e/v7x have >= 32 MiB)."""
    def footprint(bn):
        # double-buffered x tile + double-buffered resident W/gamma/beta + 2x out tile
        return (2 * bn * c * x_bytes) + (2 * d * c * x_bytes + 4 * d * 4) + (2 * d * bn * o_bytes)
    bn = max(256, (target // 256) * 256)
    while bn > 256 and footprint(bn) > vmem_budget:
        bn -= 256
    return bn


def encoder_forward(x_nc, w, gamma=None, beta=None, *, layer_norm=True, eps=1e-6,
                    block_n=None, compute_dtype=jnp.bfloat16, out_dtype=None,
                    small_n_xla=128):
    """x_nc: (N, compress_dim) node-major features, w: (out_dim, compress_dim).

    Returns PyTorch-layout (out_dim, N) = relu(LN(W @ X^T)).
    """
    n, c = x_nc.shape
    d, c_w = w.shape
    assert c == c_w, (c, c_w)
    out_dtype = compute_dtype if out_dtype is None else out_dtype

    # Mem-bound: feed bf16 (halves X DMA, doubles MXU rate on v6e/v7x); LN stays f32.
    x_c = x_nc.astype(compute_dtype)
    w_c = w.astype(compute_dtype)

    # Tiny batches: bypass Pallas (sub-128 lane masked stores + fixed call overhead).
    if small_n_xla is not None and n <= small_n_xla:
        return _xla_encoder(x_c, w_c, gamma, beta,
                            layer_norm=layer_norm, eps=eps, out_dtype=out_dtype)

    x_bytes = jnp.dtype(compute_dtype).itemsize
    o_bytes = jnp.dtype(out_dtype).itemsize
    if block_n is None:
        block_n = _pick_block_n(c, d, x_bytes, o_bytes)
    tm = n if n <= block_n else block_n
    grid = (pl.cdiv(n, tm),)   # no padding: Pallas clips the partial last block

    in_specs = [
        pl.BlockSpec((tm, c), lambda i: (i, 0)),   # streamed per-tile node features
        pl.BlockSpec((d, c), lambda i: (0, 0)),    # constant index -> weight resident
        # TODO(synk): for large D*C, single-buffer W/gamma/beta (pl.Buffered(1)) to
        # halve their resident footprint; at D=32,C=48 the extra buffer is ~3 KiB.
    ]
    args = [x_c, w_c]
    if layer_norm:
        in_specs += [
            pl.BlockSpec((d, 1), lambda i: (0, 0)),
            pl.BlockSpec((d, 1), lambda i: (0, 0)),
        ]
        args += [gamma.reshape(d, 1).astype(jnp.float32),
                 beta.reshape(d, 1).astype(jnp.float32)]

    cost = pl.CostEstimate(
        flops=2 * d * c * n,
        transcendentals=(2 * n) if layer_norm else 0,
        bytes_accessed=(n * c * x_bytes + d * c * x_bytes + d * n * o_bytes
                        + (2 * d * 4 if layer_norm else 0)),
    )

    kernel = functools.partial(encoder_kernel, layer_norm=layer_norm, eps=eps)
    return pl.pallas_call(
        kernel,
        out_shape=jax.ShapeDtypeStruct((d, n), out_dtype),
        grid=grid,
        in_specs=in_specs,
        out_specs=pl.BlockSpec((d, tm), lambda i: (0, i)),
        compiler_params=pltpu.CompilerParams(
            dimension_semantics=("parallel",),   # shard N tiles across v7x's 2 TCs
        ),
        cost_estimate=cost,
    )(*args)


def encoder_reference(x_nc, w, gamma=None, beta=None, *, layer_norm=True, eps=1e-6):
    """Pure-JAX f32 reference mirroring the PyTorch Encoder.forward math."""
    y = jnp.dot(w.astype(jnp.float32), x_nc.astype(jnp.float32).T)   # (D, N)
    if layer_norm:
        d = y.shape[0]
        mean = jnp.mean(y, axis=0, keepdims=True)
        var = jnp.sum((y - mean) ** 2, axis=0, keepdims=True) / (d - 1)   # torch.std
        y = (gamma.reshape(d, 1) * (y - mean) / (jnp.sqrt(var) + eps)
             + beta.reshape(d, 1))
    return jnp.maximum(y, 0.0)


def _check(out, x_in, w_in, gamma=None, beta=None, *, layer_norm=True, tol=1e-2):
    # Compare against an f32 reference computed from the same bf16-quantized inputs
    # the kernel sees (isolates kernel error from input quantization).
    ref = encoder_reference(x_in.astype(jnp.bfloat16), w_in.astype(jnp.bfloat16),
                            gamma, beta, layer_norm=layer_norm)
    out_f = out.astype(jnp.float32)
    assert out.shape == ref.shape, (out.shape, ref.shape)
    assert bool(jnp.all(out_f >= 0.0))
    assert bool(jnp.allclose(out_f, ref, rtol=tol, atol=tol)), \
        float(jnp.max(jnp.abs(out_f - ref)))


if __name__ == "__main__":
    key = jax.random.PRNGKey(0)

    # --- synthetic graph / feature setup (glue, plain JAX) ---
    num_graph_nodes = 32
    N = 8                                   # batch of query nodes
    feat_dims = {"m0": 16, "m1": 16, "m2": 16}
    relations = {"m0": [("m1", "r1"), ("m2", "r2")]}
    mode = "m0"
    out_dim = 32
    compress_dim = feat_dims[mode] + sum(feat_dims[t] for t, _ in relations[mode])  # 48

    k_e0, k_e1, k_e2, k_w = jax.random.split(key, 4)
    emb = {
        "m0": jax.random.normal(k_e0, (num_graph_nodes, feat_dims["m0"]), jnp.float32),
        "m1": jax.random.normal(k_e1, (num_graph_nodes, feat_dims["m1"]), jnp.float32),
        "m2": jax.random.normal(k_e2, (num_graph_nodes, feat_dims["m2"]), jnp.float32),
    }

    nodes = jnp.arange(N, dtype=jnp.int32)
    self_feat = jnp.take(emb[mode], nodes, axis=0)        # features(nodes, mode)

    # TODO(synk): aggregator's stochastic neighbor sampling (keep_prob/max_keep) and
    # adj_list lookup are graph-side glue; replaced by a deterministic mean-pool
    # over a fixed 2-neighbor ring adjacency.
    neigh_feats = []
    for to_mode, _rel_name in relations[mode]:
        nbrs = jnp.stack(
            [(nodes + 1) % num_graph_nodes, (nodes + 2) % num_graph_nodes], axis=1
        )  # (N, 2)
        to_feats = jnp.mean(jnp.take(emb[to_mode], nbrs, axis=0), axis=1)
        neigh_feats.append(to_feats)

    # torch.cat(neigh_feats + [self_feat], dim=0) on (feat, N) == concat on the feature
    # axis in node-major layout; order preserved: [neigh_rel1, neigh_rel2, self].
    x_nc = jnp.concatenate(neigh_feats + [self_feat], axis=1)  # (N, compress_dim)

    # Xavier-uniform init of compress_params[mode]: (out_dim, compress_dim)
    bound = (6.0 / (out_dim + compress_dim)) ** 0.5
    w = jax.random.uniform(k_w, (out_dim, compress_dim), jnp.float32, -bound, bound)

    gamma = jnp.ones((out_dim,), jnp.float32)
    beta = jnp.zeros((out_dim,), jnp.float32)

    # --- 1. tiny batch (N=8): XLA fallback path (review: kernel loses at N<=128) ---
    out_small = jax.block_until_ready(
        encoder_forward(x_nc, w, gamma, beta, layer_norm=True))
    _check(out_small, x_nc, w, gamma, beta, layer_norm=True)

    # --- 2. same tiny batch forced through the Pallas kernel (single full block) ---
    out_small_pl = jax.block_until_ready(
        encoder_forward(x_nc, w, gamma, beta, layer_norm=True, small_n_xla=None))
    _check(out_small_pl, x_nc, w, gamma, beta, layer_norm=True)

    # --- 3. tiled path with a partial last block (no pad / no slice), default tile ---
    N_big = 2500
    x_big = jax.random.normal(jax.random.PRNGKey(1), (N_big, compress_dim), jnp.float32)
    out_big = jax.block_until_ready(
        encoder_forward(x_big, w, gamma, beta, layer_norm=True))
    assert out_big.shape == (out_dim, N_big), out_big.shape
    _check(out_big, x_big, w, gamma, beta, layer_norm=True)

    # --- 4. explicit small tile (grid=2, partial tail of 44 columns) ---
    N_med = 300
    x_med = jax.random.normal(jax.random.PRNGKey(2), (N_med, compress_dim), jnp.float32)
    out_med = jax.block_until_ready(
        encoder_forward(x_med, w, gamma, beta, layer_norm=True, block_n=256))
    _check(out_med, x_med, w, gamma, beta, layer_norm=True)

    # --- 5. no-LayerNorm path (gamma/beta never DMA'd) through the Pallas kernel ---
    out_noln = jax.block_until_ready(
        encoder_forward(x_big, w, layer_norm=False))
    _check(out_noln, x_big, w, layer_norm=False)

    print("KERNEL_OK")
</pallas_src>

<mosaic_0001>
module attributes {stable_mosaic.version = 11 : i64} {
  func.func @encoder_kernel(%arg0: i32, %arg1: memref<8x48xbf16, #tpu.memory_space<vmem>>, %arg2: memref<32x48xbf16, #tpu.memory_space<vmem>>, %arg3: memref<32x1xf32, #tpu.memory_space<vmem>>, %arg4: memref<32x1xf32, #tpu.memory_space<vmem>>, %arg5: memref<32x8xbf16, #tpu.memory_space<vmem>>) attributes {dimension_semantics = [#tpu.dimension_semantics<parallel>], iteration_bounds = array<i64: 1>, scalar_prefetch = 0 : i64, scratch_operands = 0 : i64, tpu.core_type = #tpu.core_type<tc>, window_params = [{transform_indices = @transform_0, window_bounds = array<i64: 8, 48>}, {pipeline_mode = #tpu.pipeline_mode<synchronous>, transform_indices = @transform_1, window_bounds = array<i64: 32, 48>}, {pipeline_mode = #tpu.pipeline_mode<synchronous>, transform_indices = @transform_2, window_bounds = array<i64: 32, 1>}, {pipeline_mode = #tpu.pipeline_mode<synchronous>, transform_indices = @transform_3, window_bounds = array<i64: 32, 1>}, {transform_indices = @transform_4, window_bounds = array<i64: 32, 8>}]} {
    %c0 = arith.constant 0 : index
    %c0_0 = arith.constant 0 : index
    %0 = vector.load %arg2[%c0, %c0_0] : memref<32x48xbf16, #tpu.memory_space<vmem>>, vector<32x48xbf16>
    %c0_1 = arith.constant 0 : index
    %c0_2 = arith.constant 0 : index
    %1 = vector.load %arg1[%c0_1, %c0_2] : memref<8x48xbf16, #tpu.memory_space<vmem>>, vector<8x48xbf16>
    %cst = arith.constant dense<0.000000e+00> : vector<32x8xf32>
    %2 = tpu.matmul %0, %1, %cst {dimension_numbers = #tpu.dot_dimension_numbers<[1], [1], [0], [0], [0, 0, 1, 0], [], []>} : vector<32x48xbf16>, vector<8x48xbf16>, vector<32x8xf32> -> vector<32x8xf32>
    %cst_3 = arith.constant dense<0.000000e+00> : vector<8xf32>
    %3 = vector.multi_reduction <add>, %2, %cst_3 [0] : vector<32x8xf32> to vector<8xf32>
    %4 = vector.shape_cast %3 : vector<8xf32> to vector<1x8xf32>
    %5 = arith.mulf %2, %2 : vector<32x8xf32>
    %cst_4 = arith.constant dense<0.000000e+00> : vector<8xf32>
    %6 = vector.multi_reduction <add>, %5, %cst_4 [0] : vector<32x8xf32> to vector<8xf32>
    %7 = vector.shape_cast %6 : vector<8xf32> to vector<1x8xf32>
    %cst_5 = arith.constant 3.125000e-02 : f32
    %8 = vector.broadcast %cst_5 : f32 to vector<1x8xf32>
    %9 = arith.mulf %4, %8 : vector<1x8xf32>
    %cst_6 = arith.constant 3.200000e+01 : f32
    %10 = vector.broadcast %cst_6 : f32 to vector<1x8xf32>
    %11 = arith.mulf %10, %9 : vector<1x8xf32>
    %12 = arith.mulf %11, %9 : vector<1x8xf32>
    %13 = arith.subf %7, %12 : vector<1x8xf32>
    %cst_7 = arith.constant 0.0322580636 : f32
    %14 = vector.broadcast %cst_7 : f32 to vector<1x8xf32>
    %15 = arith.mulf %13, %14 : vector<1x8xf32>
    %cst_8 = arith.constant 0.000000e+00 : f32
    %16 = vector.broadcast %cst_8 : f32 to vector<1x8xf32>
    %17 = arith.maximumf %15, %16 : vector<1x8xf32>
    %18 = math.sqrt %17 : vector<1x8xf32>
    %cst_9 = arith.constant 9.99999997E-7 : f32
    %19 = vector.broadcast %cst_9 : f32 to vector<1x8xf32>
    %20 = arith.addf %18, %19 : vector<1x8xf32>
    %21 = tpu.reciprocal %20 {approx = true} : vector<1x8xf32> -> vector<1x8xf32>
    %c0_10 = arith.constant 0 : index
    %c0_11 = arith.constant 0 : index
    %22 = vector.load %arg3[%c0_10, %c0_11] : memref<32x1xf32, #tpu.memory_space<vmem>>, vector<32x1xf32>
    %23 = vector.broadcast %9 : vector<1x8xf32> to vector<32x8xf32>
    %24 = arith.subf %2, %23 : vector<32x8xf32>
    %25 = vector.broadcast %21 : vector<1x8xf32> to vector<32x8xf32>
    %26 = arith.mulf %24, %25 : vector<32x8xf32>
    %27 = vector.broadcast %22 : vector<32x1xf32> to vector<32x8xf32>
    %28 = arith.mulf %27, %26 : vector<32x8xf32>
    %c0_12 = arith.constant 0 : index
    %c0_13 = arith.constant 0 : index
    %29 = vector.load %arg4[%c0_12, %c0_13] : memref<32x1xf32, #tpu.memory_space<vmem>>, vector<32x1xf32>
    %30 = vector.broadcast %29 : vector<32x1xf32> to vector<32x8xf32>
    %31 = arith.addf %28, %30 : vector<32x8xf32>
    %cst_14 = arith.constant 0.000000e+00 : f32
    %32 = vector.broadcast %cst_14 : f32 to vector<32x8xf32>
    %33 = arith.maximumf %31, %32 : vector<32x8xf32>
    %34 = arith.truncf %33 : vector<32x8xf32> to vector<32x8xbf16>
    %c0_15 = arith.constant 0 : index
    %c0_16 = arith.constant 0 : index
    %35 = vector.load %arg5[%c0_15, %c0_16] : memref<32x8xbf16, #tpu.memory_space<vmem>>, vector<32x8xbf16>
    tpu.vector_store %arg5[%c0_15, %c0_16], %34 {strides = array<i32>} : memref<32x8xbf16, #tpu.memory_space<vmem>>, vector<32x8xbf16>,
    return
  }
  func.func @transform_0(%arg0: i32) -> (i32, i32) {
    %c0_i32 = arith.constant 0 : i32
    %c0_i32_0 = arith.constant 0 : i32
    return %arg0, %c0_i32 : i32, i32
  }
  func.func @transform_1(%arg0: i32) -> (i32, i32) {
    %c0_i32 = arith.constant 0 : i32
    %c0_i32_0 = arith.constant 0 : i32
    %c0_i32_1 = arith.constant 0 : i32
    return %c0_i32, %c0_i32_0 : i32, i32
  }
  func.func @transform_2(%arg0: i32) -> (i32, i32) {
    %c0_i32 = arith.constant 0 : i32
    %c0_i32_0 = arith.constant 0 : i32
    %c0_i32_1 = arith.constant 0 : i32
    return %c0_i32, %c0_i32_0 : i32, i32
  }
  func.func @transform_3(%arg0: i32) -> (i32, i32) {
    %c0_i32 = arith.constant 0 : i32
    %c0_i32_0 = arith.constant 0 : i32
    %c0_i32_1 = arith.constant 0 : i32
    return %c0_i32, %c0_i32_0 : i32, i32
  }
  func.func @transform_4(%arg0: i32) -> (i32, i32) {
    %c0_i32 = arith.constant 0 : i32
    %c0_i32_0 = arith.constant 0 : i32
    return %c0_i32, %arg0 : i32, i32
  }
}

</mosaic_0001>

<llo_original>
// kernel: tpu_custom_call.1
$region0: #{tpu_custom_call.1}
  #allocation0 [shape = 'u32[]', space=smem, size = 0x4, offset = 0x4, fixed_abs, tag = 'smem constant byte address 0x4 - core index']
  #allocation1 [shape = 'u32[72,128]{1,0:T(1,128)}', space=vmem, size = 0x9000, scoped, tag = 'internal scratch']
  %s0 = inlined_call_operand.vmem [shape: bf16[8,48], index: 0, kind: input, shape index: {}]
  %s1 = inlined_call_operand.vmem [shape: bf16[32,48], index: 1, kind: input, shape index: {}]
  %s2 = inlined_call_operand.vmem [shape: f32[32,1], index: 2, kind: input, shape index: {}]
  %s3 = inlined_call_operand.vmem [shape: f32[32,1], index: 3, kind: input, shape index: {}]
  %s4 = inlined_call_operand.vmem [shape: bf16[32,8], index: 4, kind: output, shape index: {}]
  %s5 = sld [smem:[#allocation0]]
  $region26: #{tpu_custom_call.1} parent=0
    _
  %s7 = ssub.s32 1, %s5
  %s8 = scalar_select 0, %s7, %s5
  // Predicated region
  $region2: #{tpu_custom_call.1} parent=0 // pred_check
    _
  $region3: #{tpu_custom_call.1} parent=0 // pred_check_branch
    %10 = sbr.rel (0) target = $region5
  $region4: #{tpu_custom_call.1} parent=0 // pred_region
    _
  $region5: #{tpu_custom_call.1} parent=0 // pred_fallthru
    _
  // Predicated region
  $region6: #{tpu_custom_call.1} parent=0 // pred_check
    _
  $region7: #{tpu_custom_call.1} parent=0 // pred_check_branch
    %12 = sbr.rel (0) target = $region9
  $region8: #{tpu_custom_call.1} parent=0 // pred_region
    _
  $region9: #{tpu_custom_call.1} parent=0 // pred_fallthru
    _
  // Predicated region
  $region10: #{tpu_custom_call.1} parent=0 // pred_check
    _
  $region11: #{tpu_custom_call.1} parent=0 // pred_check_branch
    %14 = sbr.rel (0) target = $region13
  $region12: #{tpu_custom_call.1} parent=0 // pred_region
    _
  $region13: #{tpu_custom_call.1} parent=0 // pred_fallthru
    _
  // Predicated region
  $region14: #{tpu_custom_call.1} parent=0 // pred_check
    _
  $region15: #{tpu_custom_call.1} parent=0 // pred_check_branch
    %16 = sbr.rel (0) target = $region17
  $region16: #{tpu_custom_call.1} parent=0 // pred_region
    _
  $region17: #{tpu_custom_call.1} parent=0 // pred_fallthru
    _
  %v18 = vld [vmem:[%s1] sm:$0xf]
  %v19 = vld [vmem:[%s1 + $0x4] sm:$0xf]
  %v20 = vld [vmem:[%s1 + $0x8] sm:$0xf]
  %v21 = vld [vmem:[%s1 + $0xc] sm:$0xf]
  %v22 = vld [vmem:[%s0] sm:$0xf]
  %v27 = vunpack.c.l.b16 %v18
  %v28 = vunpack.c.l.b16 %v19
  %v29 = vunpack.c.l.b16 %v20
  %v30 = vunpack.c.l.b16 %v21
  %v31 = vpack.c.b16 %v28, %v27
  %v32 = vpack.c.b16 %v30, %v29
  %vm33 = vcmask 392192
  %v35 = vsel %vm33, %v31, 0
  %v38 = vsel %vm33, %v32, 0
  %v41 = vsel %vm33, %v22, 0
  %43 = vmatpush.bf16.xpose.msra.mxu0 0
  %44 = vmatpush.bf16.xpose.msra.mxu0 0
  %45 = vmatpush.bf16.xpose.msra.mxu0 0
  %46 = vmatpush.bf16.xpose.msra.mxu0 0
  %47 = vmatpush.bf16.xpose.msra.mxu0 0
  %48 = vmatpush.bf16.xpose.msra.mxu0 0
  %49 = vmatpush.bf16.xpose.msra.mxu0 0
  %50 = vmatpush.bf16.xpose.msra.mxu0 %v41
  %51 = vmatmul.bf16.gmra.mxu0 %v35
  %v52 = vpop.f32.mrf.mxu0
  %v53 = vadd.f32 0.0, %v52
  %v54 = vpop.f32.mrf.mxu0
  %v55 = vadd.f32 0.0, %v54
  %56 = vmatmul.bf16.gmra.mxu0 %v38
  %v57 = vpop.f32.mrf.mxu0
  %v58 = vadd.f32 0.0, %v57
  %v59 = vpop.f32.mrf.mxu0
  %v60 = vadd.f32 0.0, %v59
  %61 = vdwg.mxu0
  %vm62 = vcmask 64512
  %v63 = vsel %vm62, %v53, 0.0
  %v64 = vsel %vm62, %v55, 0.0
  %v65 = vadd.f32 %v63, %v64
  %v66 = vsel %vm62, %v58, 0.0
  %v67 = vadd.f32 %v65, %v66
  %v68 = vsel %vm62, %v60, 0.0
  %v69 = vadd.f32 %v67, %v68
  %v70 = vrot.slane %v69, 4
  %v71 = vadd.f32 %v69, %v70
  %v72 = vrot.slane %v71, 2
  %v73 = vadd.f32 %v71, %v72
  %v74 = vrot.slane %v73, 1
  %v75 = vadd.f32 %v73, %v74
  %v76 = vmul.f32 %v53, %v53
  %v77 = vmul.f32 %v55, %v55
  %v78 = vmul.f32 %v58, %v58
  %v79 = vmul.f32 %v60, %v60
  %v80 = vsel %vm62, %v76, 0.0
  %v81 = vsel %vm62, %v77, 0.0
  %v82 = vadd.f32 %v80, %v81
  %v83 = vsel %vm62, %v78, 0.0
  %v84 = vadd.f32 %v82, %v83
  %v85 = vsel %vm62, %v79, 0.0
  %v86 = vadd.f32 %v84, %v85
  %v87 = vrot.slane %v86, 4
  %v88 = vadd.f32 %v86, %v87
  %v89 = vrot.slane %v88, 2
  %v90 = vadd.f32 %v88, %v89
  %v91 = vrot.slane %v90, 1
  %v92 = vadd.f32 %v90, %v91
  %v93 = vmul.f32 %v75, 0.03125
  %v94 = vmul.f32 %v93, 32.0
  %v95 = vmul.f32 %v94, %v93
  %v96 = vsub.f32 %v92, %v95
  %v97 = vmul.f32 %v96, 0.032258064
  %v98 = vmax.f32 %v97, 0.0
  %v99 = vrsqrt.pop %v98
  %v100 = vmul.f32 %v99, %v98
  %v101 = vmul.f32 %v100, %v99
  %v102 = vmul.f32 0.5, %v101
  %v103 = vsub.f32 1.5, %v102
  %v104 = vmul.f32 %v99, %v103
  %v105 = vmul.f32 %v98, %v104
  %vm106 = vcmp.eq.f32.partialorder %v98, inf
  %v107 = vsel %vm106, %v98, %v105
  %vm108 = vcmp.eq.f32.partialorder %v98, 0.0
  %v109 = vand.u32 %v98, 2147483648
  %v110 = vsel %vm108, %v109, %v107
  %v111 = vadd.f32 %v110, 1e-06
  %v112 = vrcp.pop %v111
  %v113 = vld [vmem:[%s2] sm:$0xff]
  %v114 = vld [vmem:[%s2 + $0x8] sm:$0xff]
  %v115 = vld [vmem:[%s2 + $0x10] sm:$0xff]
  %v116 = vld [vmem:[%s2 + $0x18] sm:$0xff]
  %v117 = vsub.f32 %v53, %v93
  %v118 = vsub.f32 %v55, %v93
  %v119 = vsub.f32 %v58, %v93
  %v120 = vsub.f32 %v60, %v93
  %v121 = vmul.f32 %v117, %v112
  %v122 = vmul.f32 %v118, %v112
  %v123 = vmul.f32 %v119, %v112
  %v124 = vmul.f32 %v120, %v112
  %126 = vset.pattern.permute.xlu0 0
  %127 = vperm.xlu0 %126, %v113
  %v128 = vpop.permute.xlu0 %127
  %131 = vset.pattern.permute.xlu0 0
  %132 = vperm.xlu0 %131, %v114
  %v133 = vpop.permute.xlu0 %132
  %136 = vset.pattern.permute.xlu0 0
  %137 = vperm.xlu0 %136, %v115
  %v138 = vpop.permute.xlu0 %137
  %141 = vset.pattern.permute.xlu0 0
  %142 = vperm.xlu0 %141, %v116
  %v143 = vpop.permute.xlu0 %142
  %v145 = vmul.f32 %v128, %v121
  %v146 = vmul.f32 %v133, %v122
  %v147 = vmul.f32 %v138, %v123
  %v148 = vmul.f32 %v143, %v124
  %v149 = vld [vmem:[%s3] sm:$0xff]
  %v150 = vld [vmem:[%s3 + $0x8] sm:$0xff]
  %v151 = vld [vmem:[%s3 + $0x10] sm:$0xff]
  %v152 = vld [vmem:[%s3 + $0x18] sm:$0xff]
  %154 = vset.pattern.permute.xlu0 0
  %155 = vperm.xlu0 %154, %v149
  %v156 = vpop.permute.xlu0 %155
  %159 = vset.pattern.permute.xlu0 0
  %160 = vperm.xlu0 %159, %v150
  %v161 = vpop.permute.xlu0 %160
  %164 = vset.pattern.permute.xlu0 0
  %165 = vperm.xlu0 %164, %v151
  %v166 = vpop.permute.xlu0 %165
  %169 = vset.pattern.permute.xlu0 0
  %170 = vperm.xlu0 %169, %v152
  %v171 = vpop.permute.xlu0 %170
  %v173 = vadd.f32 %v145, %v156
  %v174 = vadd.f32 %v146, %v161
  %v175 = vadd.f32 %v147, %v166
  %v176 = vadd.f32 %v148, %v171
  %v177 = vmax.f32 %v173, 0.0
  %v178 = vmax.f32 %v174, 0.0
  %v179 = vmax.f32 %v175, 0.0
  %v180 = vmax.f32 %v176, 0.0
  %v181 = vpack.c.bf16 %v177, %v177
  %v182 = vpack.c.bf16 %v178, %v178
  %v183 = vpack.c.bf16 %v179, %v179
  %v184 = vpack.c.bf16 %v180, %v180
  %vm185 = vcmask 60416
  %186 = vst.msk [vmem:[%s4] sm:$0xf] %vm185, %v181
  %187 = vst.msk [vmem:[%s4 + $0x4] sm:$0xf] %vm185, %v182
  %188 = vst.msk [vmem:[%s4 + $0x8] sm:$0xf] %vm185, %v183
  %189 = vst.msk [vmem:[%s4 + $0xc] sm:$0xf] %vm185, %v184
  // Predicated region
  $region18: #{tpu_custom_call.1} parent=0 // pred_check
    _
  $region19: #{tpu_custom_call.1} parent=0 // pred_check_branch
    %191 = sbr.rel (0) target = $region21
  $region20: #{tpu_custom_call.1} parent=0 // pred_region
    _
  $region21: #{tpu_custom_call.1} parent=0 // pred_fallthru
    _
  // Predicated region
  $region22: #{tpu_custom_call.1} parent=0 // pred_check
    _
  $region23: #{tpu_custom_call.1} parent=0 // pred_check_branch
    %193 = sbr.rel (0) target = $region25
  $region24: #{tpu_custom_call.1} parent=0 // pred_region
    _
  $region25: #{tpu_custom_call.1} parent=0 // pred_fallthru
    _

</llo_original>
